<compile_context>
chip_gen: v5e
topology: v5e:2x2
jax: 0.10.0
libtpu: 0.0.40
codegen_flags: <defaults>
</compile_context>

<pallas_src>
import jax
import jax.numpy as jnp
import jax.scipy.linalg as jsl
import numpy as np
from jax.experimental import pallas as pl
from jax.experimental.pallas import tpu as pltpu


# ----------------------------------------------------------------------------
# Pallas kernel: fused ActNorm affine + invertible 1x1 conv
# ----------------------------------------------------------------------------
def _actnorm_invconv_kernel(x_ref, loc_ref, scale_ref, w_ref, act_ref, out_ref):
    """x_ref: (1, C, T) lane-dense slab; loc/scale: (C, 1); w_ref: (C, C).

    act_out = scale * (x + loc)          (per-channel affine, VPU)
    w_out   = weight @ act_out           (1x1 conv == channel-mixing matmul, MXU)
    """
    x = x_ref[0]                                          # (C, T)
    act = scale_ref[...] * (x + loc_ref[...])             # (C,1) broadcast -> (C,T)
    act_ref[0] = act.astype(act_ref.dtype)
    out_ref[0] = jnp.dot(w_ref[...], act,
                         preferred_element_type=jnp.float32).astype(out_ref.dtype)


def _pick_lane_tile(hw, max_tile=2048):
    """Largest lane tile <= max_tile dividing hw (multiple of 128 when split)."""
    if hw <= max_tile:
        return hw
    t = (max_tile // 128) * 128
    while t >= 128:
        if hw % t == 0:
            return t
        t -= 128
    return hw


def actnorm_invconv_pallas(x_nchw, loc, scale, weight):
    """Fused ActNorm + 1x1 invertible conv.  Returns (act_out, w_out) in NCHW."""
    B, C, H, W = x_nchw.shape
    HW = H * W
    T = _pick_lane_tile(HW)

    x2 = x_nchw.reshape(B, C, HW)                         # free contiguous view
    loc2 = loc.reshape(C, 1).astype(jnp.float32)
    scale2 = scale.reshape(C, 1).astype(jnp.float32)
    w2 = weight.astype(jnp.float32)                       # (Cout, Cin), 1x1 squeezed

    grid = (B, HW // T)
    act2, out2 = pl.pallas_call(
        _actnorm_invconv_kernel,
        out_shape=(jax.ShapeDtypeStruct((B, C, HW), x_nchw.dtype),
                   jax.ShapeDtypeStruct((B, C, HW), x_nchw.dtype)),
        grid=grid,
        in_specs=[
            pl.BlockSpec((1, C, T), lambda b, j: (b, 0, j)),
            pl.BlockSpec((C, 1), lambda b, j: (0, 0)),
            pl.BlockSpec((C, 1), lambda b, j: (0, 0)),
            pl.BlockSpec((C, C), lambda b, j: (0, 0)),
        ],
        out_specs=(pl.BlockSpec((1, C, T), lambda b, j: (b, 0, j)),
                   pl.BlockSpec((1, C, T), lambda b, j: (b, 0, j))),
        compiler_params=pltpu.CompilerParams(
            dimension_semantics=("parallel", "parallel")),
    )(x2, loc2, scale2, w2)
    return act2.reshape(B, C, H, W), out2.reshape(B, C, H, W)


# Pure-JAX reference for the same fused piece (correctness check).
def actnorm_invconv_ref(x_nchw, loc, scale, weight):
    act = scale[None, :, None, None] * (x_nchw + loc[None, :, None, None])
    w_out = jnp.einsum("oi,bihw->bohw", weight, act,
                       precision=jax.lax.Precision.HIGHEST)
    return act, w_out


# ----------------------------------------------------------------------------
# Plain-JAX parameter glue (parameter-only / one-off math, no kernel needed)
# ----------------------------------------------------------------------------
def actnorm_initialize(x_nchw):
    """ActNorm data-dependent init (PyTorch first-forward semantics)."""
    C = x_nchw.shape[1]
    flat = jnp.transpose(x_nchw, (1, 0, 2, 3)).reshape(C, -1)
    mean = jnp.mean(flat, axis=1)
    std = jnp.std(flat, axis=1, ddof=1)          # torch.std default: unbiased
    return -mean, 1.0 / (std + 1e-6)


def invconv_lu_calc_weight(p):
    C = p["w_l"].shape[0]
    l_mask = jnp.tril(jnp.ones((C, C), jnp.float32), -1)
    u_mask = l_mask.T
    eye = jnp.eye(C, dtype=jnp.float32)
    return (p["w_p"]
            @ (p["w_l"] * l_mask + eye)
            @ (p["w_u"] * u_mask + jnp.diag(p["s_sign"] * jnp.exp(p["w_s"]))))


def transition_forward(x_nchw, actnorm_loc, actnorm_scale, invconv_params,
                       *, conv_lu=True, initialized=False,
                       conv_fn=actnorm_invconv_pallas):
    """transition.forward: returns (act_out, w_out, out, logdet)."""
    _, _, H, W = x_nchw.shape
    if not initialized:
        # Fresh module: first forward runs ActNorm's data-dependent init.
        actnorm_loc, actnorm_scale = actnorm_initialize(x_nchw)

    if conv_lu:
        weight = invconv_lu_calc_weight(invconv_params)
        w_det1 = H * W * jnp.sum(invconv_params["w_s"])
    else:
        weight = invconv_params["weight"]
        # TODO(synk): PyTorch computes slogdet in float64 (.double()); TPU f32 here.
        w_det1 = H * W * jnp.linalg.slogdet(weight)[1]

    act_out, w_out = conv_fn(x_nchw, actnorm_loc, actnorm_scale, weight)

    act_logdet = H * W * jnp.sum(jnp.log(jnp.abs(actnorm_scale)))
    logdet = act_logdet + w_det1
    return act_out, w_out, w_out, logdet


# ----------------------------------------------------------------------------
# Deterministic parameter init (mirrors InvConv2dLU.__init__)
# ----------------------------------------------------------------------------
def init_invconv_lu_params(key, in_channel):
    w = jax.random.normal(key, (in_channel, in_channel), jnp.float32)
    q, _ = jnp.linalg.qr(w)
    p_mat, l, u = jsl.lu(q)
    w_s = jnp.diag(u)
    return {
        "w_p": p_mat.astype(jnp.float32),
        "w_l": l.astype(jnp.float32),
        "w_u": jnp.triu(u, 1).astype(jnp.float32),
        "w_s": jnp.log(jnp.abs(w_s)).astype(jnp.float32),
        "s_sign": jnp.sign(w_s).astype(jnp.float32),
    }


# ----------------------------------------------------------------------------
if __name__ == "__main__":
    key = jax.random.PRNGKey(0)
    kx, kq = jax.random.split(key)

    B, C, H, W = 2, 4, 16, 16
    x = jax.random.normal(kx, (B, C, H, W), jnp.float32)

    lu_params = init_invconv_lu_params(kq, C)
    # ActNorm parameters as in a fresh PyTorch module (loc=0, scale=1,
    # initialized=0 -> data-dependent init happens inside the forward).
    loc0 = jnp.zeros((C,), jnp.float32)
    scale0 = jnp.ones((C,), jnp.float32)

    act_out, w_out, out, logdet = transition_forward(
        x, loc0, scale0, lu_params, conv_lu=True, initialized=False,
        conv_fn=actnorm_invconv_pallas)
    act_out, w_out, out, logdet = jax.block_until_ready(
        (act_out, w_out, out, logdet))

    # Pure-JAX reference check.
    act_r, w_r, out_r, logdet_r = transition_forward(
        x, loc0, scale0, lu_params, conv_lu=True, initialized=False,
        conv_fn=actnorm_invconv_ref)

    np.testing.assert_allclose(np.asarray(act_out), np.asarray(act_r),
                               rtol=1e-5, atol=1e-5)
    np.testing.assert_allclose(np.asarray(w_out), np.asarray(w_r),
                               rtol=1e-5, atol=1e-5)
    np.testing.assert_allclose(np.asarray(out), np.asarray(out_r),
                               rtol=1e-5, atol=1e-5)
    np.testing.assert_allclose(np.asarray(logdet), np.asarray(logdet_r),
                               rtol=1e-5, atol=1e-5)

    print("KERNEL_OK")
</pallas_src>

<mosaic_0001>
module attributes {stable_mosaic.version = 11 : i64} {
  func.func @_actnorm_invconv_kernel(%arg0: i32, %arg1: i32, %arg2: memref<1x4x256xf32, #tpu.memory_space<vmem>>, %arg3: memref<4x1xf32, #tpu.memory_space<vmem>>, %arg4: memref<4x1xf32, #tpu.memory_space<vmem>>, %arg5: memref<4x4xf32, #tpu.memory_space<vmem>>, %arg6: memref<1x4x256xf32, #tpu.memory_space<vmem>>, %arg7: memref<1x4x256xf32, #tpu.memory_space<vmem>>) attributes {dimension_semantics = [#tpu.dimension_semantics<parallel>, #tpu.dimension_semantics<parallel>], iteration_bounds = array<i64: 2, 1>, scalar_prefetch = 0 : i64, scratch_operands = 0 : i64, tpu.core_type = #tpu.core_type<tc>, window_params = [{transform_indices = @transform_0, window_bounds = array<i64: 1, 4, 256>}, {pipeline_mode = #tpu.pipeline_mode<synchronous>, transform_indices = @transform_1, window_bounds = array<i64: 4, 1>}, {pipeline_mode = #tpu.pipeline_mode<synchronous>, transform_indices = @transform_2, window_bounds = array<i64: 4, 1>}, {pipeline_mode = #tpu.pipeline_mode<synchronous>, transform_indices = @transform_3, window_bounds = array<i64: 4, 4>}, {transform_indices = @transform_4, window_bounds = array<i64: 1, 4, 256>}, {transform_indices = @transform_5, window_bounds = array<i64: 1, 4, 256>}]} {
    %c0 = arith.constant 0 : index
    %c0_0 = arith.constant 0 : index
    %c0_1 = arith.constant 0 : index
    %0 = vector.load %arg2[%c0, %c0_0, %c0_1] : memref<1x4x256xf32, #tpu.memory_space<vmem>>, vector<1x4x256xf32>
    %1 = vector.shape_cast %0 : vector<1x4x256xf32> to vector<4x256xf32>
    %c0_2 = arith.constant 0 : index
    %c0_3 = arith.constant 0 : index
    %2 = vector.load %arg4[%c0_2, %c0_3] : memref<4x1xf32, #tpu.memory_space<vmem>>, vector<4x1xf32>
    %c0_4 = arith.constant 0 : index
    %c0_5 = arith.constant 0 : index
    %3 = vector.load %arg3[%c0_4, %c0_5] : memref<4x1xf32, #tpu.memory_space<vmem>>, vector<4x1xf32>
    %4 = vector.broadcast %3 : vector<4x1xf32> to vector<4x256xf32>
    %5 = arith.addf %1, %4 : vector<4x256xf32>
    %6 = vector.broadcast %2 : vector<4x1xf32> to vector<4x256xf32>
    %7 = arith.mulf %6, %5 : vector<4x256xf32>
    %c0_6 = arith.constant 0 : index
    %c0_7 = arith.constant 0 : index
    %c0_8 = arith.constant 0 : index
    %8 = vector.load %arg6[%c0_6, %c0_7, %c0_8] : memref<1x4x256xf32, #tpu.memory_space<vmem>>, vector<1x4x256xf32>
    %9 = vector.shape_cast %8 : vector<1x4x256xf32> to vector<4x256xf32>
    %10 = vector.shape_cast %7 : vector<4x256xf32> to vector<1x4x256xf32>
    tpu.vector_store %arg6[%c0_6, %c0_7, %c0_8], %10 {strides = array<i32>} : memref<1x4x256xf32, #tpu.memory_space<vmem>>, vector<1x4x256xf32>,
    %c0_9 = arith.constant 0 : index
    %c0_10 = arith.constant 0 : index
    %11 = vector.load %arg5[%c0_9, %c0_10] : memref<4x4xf32, #tpu.memory_space<vmem>>, vector<4x4xf32>
    %cst = arith.constant dense<0.000000e+00> : vector<4x256xf32>
    %12 = tpu.matmul %11, %7, %cst {dimension_numbers = #tpu.dot_dimension_numbers<[1], [0], [0], [1], [0, 0, 1, 1], [], []>} : vector<4x4xf32>, vector<4x256xf32>, vector<4x256xf32> -> vector<4x256xf32>
    %c0_11 = arith.constant 0 : index
    %c0_12 = arith.constant 0 : index
    %c0_13 = arith.constant 0 : index
    %13 = vector.load %arg7[%c0_11, %c0_12, %c0_13] : memref<1x4x256xf32, #tpu.memory_space<vmem>>, vector<1x4x256xf32>
    %14 = vector.shape_cast %13 : vector<1x4x256xf32> to vector<4x256xf32>
    %15 = vector.shape_cast %12 : vector<4x256xf32> to vector<1x4x256xf32>
    tpu.vector_store %arg7[%c0_11, %c0_12, %c0_13], %15 {strides = array<i32>} : memref<1x4x256xf32, #tpu.memory_space<vmem>>, vector<1x4x256xf32>,
    return
  }
  func.func @transform_0(%arg0: i32, %arg1: i32) -> (i32, i32, i32) {
    %c0_i32 = arith.constant 0 : i32
    %c0_i32_0 = arith.constant 0 : i32
    return %arg0, %c0_i32, %arg1 : i32, i32, i32
  }
  func.func @transform_1(%arg0: i32, %arg1: i32) -> (i32, i32) {
    %c0_i32 = arith.constant 0 : i32
    %c0_i32_0 = arith.constant 0 : i32
    %c0_i32_1 = arith.constant 0 : i32
    return %c0_i32, %c0_i32_0 : i32, i32
  }
  func.func @transform_2(%arg0: i32, %arg1: i32) -> (i32, i32) {
    %c0_i32 = arith.constant 0 : i32
    %c0_i32_0 = arith.constant 0 : i32
    %c0_i32_1 = arith.constant 0 : i32
    return %c0_i32, %c0_i32_0 : i32, i32
  }
  func.func @transform_3(%arg0: i32, %arg1: i32) -> (i32, i32) {
    %c0_i32 = arith.constant 0 : i32
    %c0_i32_0 = arith.constant 0 : i32
    %c0_i32_1 = arith.constant 0 : i32
    return %c0_i32, %c0_i32_0 : i32, i32
  }
  func.func @transform_4(%arg0: i32, %arg1: i32) -> (i32, i32, i32) {
    %c0_i32 = arith.constant 0 : i32
    %c0_i32_0 = arith.constant 0 : i32
    return %arg0, %c0_i32, %arg1 : i32, i32, i32
  }
  func.func @transform_5(%arg0: i32, %arg1: i32) -> (i32, i32, i32) {
    %c0_i32 = arith.constant 0 : i32
    %c0_i32_0 = arith.constant 0 : i32
    return %arg0, %c0_i32, %arg1 : i32, i32, i32
  }
}

</mosaic_0001>

<llo_original>
// kernel: tpu_custom_call.1
$region0: #{tpu_custom_call.1}
  #allocation0 [shape = 'u32[]', space=smem, size = 0x4, offset = 0x4, fixed_abs, tag = 'smem constant byte address 0x4 - core index']
  #allocation1 [shape = 'u32[72,128]{1,0:T(1,128)}', space=vmem, size = 0x9000, scoped, tag = 'internal scratch']
  %s0 = inlined_call_operand.hbm [shape: f32[2,4,256], index: 0, kind: input, shape index: {}]
  %s1 = inlined_call_operand.vmem [shape: f32[4,1], index: 1, kind: input, shape index: {}]
  %s2 = inlined_call_operand.vmem [shape: f32[4,1], index: 2, kind: input, shape index: {}]
  %s3 = inlined_call_operand.vmem [shape: f32[4,4], index: 3, kind: input, shape index: {}]
  %s4 = inlined_call_operand.hbm [shape: f32[2,4,256], index: 4, kind: output, shape index: {0}]
  %s5 = inlined_call_operand.hbm [shape: f32[2,4,256], index: 5, kind: output, shape index: {1}]
  %6 = xla_tuple %s4, %s5
  %s7 = sld [smem:[#allocation0]]
  $region61: #{tpu_custom_call.1} parent=0
    _
  %s9 = ssub.s32 1, %s7
  %s10 = scalar_select 0, %s9, %s7
  $region1: #{tpu_custom_call.1} parent=0
    #allocation2 [shape = 'u8[8192]{0}', space=vmem, size = 0x2000, scoped, tag = 'input window, operand 0']
    #allocation3 [shape = 's32[2]{0}', space=sflag, size = 0x8, scoped, tag = 'scoped memory for tpu_custom_call.1']
    #allocation4 [shape = 's32[2]{0}', space=sflag, size = 0x8, scoped, tag = 'scoped memory for tpu_custom_call.1']
    #allocation5 [shape = 'u8[8192]{0}', space=vmem, size = 0x2000, scoped, tag = 'output window, operand 0']
    #allocation6 [shape = 'u8[8192]{0}', space=vmem, size = 0x2000, scoped, tag = 'output window, operand 1']
    #allocation7 [shape = 's32[2]{0}', space=sflag, size = 0x8, scoped, tag = 'scoped memory for tpu_custom_call.1']
    %11 = vsyncpa [#allocation3], 0
    %s12 = scalar_lea.sflag [#allocation3], 1
    %13 = vsyncpa %s12, 0
    %14 = vsyncpa [#allocation4], 0
    %s15 = scalar_lea.sflag [#allocation4], 1
    %16 = vsyncpa %s15, 0
    %17 = vsyncpa [#allocation7], 0
    %s18 = scalar_lea.sflag [#allocation7], 1
    %19 = vsyncpa %s18, 0
    loop: start=0, step=1, limit=4
    $region2: #{tpu_custom_call.1} parent=1 // loop_pre_header
      _
    $region3: #{tpu_custom_call.1} parent=1 // loop_header
      %s21 = sphi 0, %s25
      %p22 = scmp.ge.s32.totalorder %s21, 4
      %s28 = sphi 0, %s40
      %s29 = sphi 0, %s36
      %s30 = sphi 0, %s28
      %s31 = sphi 0, %s29
      %s32 = sphi 0, %s30
      %s33 = sphi 0, %s31
      %s45 = sphi 0, %s47
      %s48 = sphi 0, %s45
      %s49 = sphi 0, %s48
      %s65 = sphi 0, %s49
      %s69 = sphi 0, %s69
      %s71 = sphi 0, %s69
      %s72 = sphi 0, %s71
      %s86 = sphi 0, %s72
      %s90 = sphi 0, %s90
      %s92 = sphi 0, %s90
      %s93 = sphi 0, %s92
      %s107 = sphi 0, %s93
      %s111 = sphi 0, %s111
      %s113 = sphi 0, %s111
      %s114 = sphi 0, %s113
      %s128 = sphi 0, %s114
      %s136 = sphi 0, %s138
      %s139 = sphi 0, %s136
      %s140 = sphi 0, %s139
      %s156 = sphi 0, %s140
      %s164 = sphi 0, %s166
      %s167 = sphi 0, %s164
      %s168 = sphi 0, %s167
      %s184 = sphi 0, %s168
    $region4: #{tpu_custom_call.1} parent=1 // loop_header_branch
      %24 = sbr.rel (%p22) target = $region8
    $region5: #{tpu_custom_call.1} parent=1 // loop_body
      %s26 = ssub.s32 %s21, 1
      %s27 = ssub.s32 %s21, 2
      %s34 = sadd.s32 1, %s29
      %p35 = scmp.ge.s32.totalorder %s34, 1
      %s36 = scalar_select %p35, 0, %s34
      %s37 = sadd.s32 1, %s28
      %s38 = scalar_select %p35, %s37, %s28
      %p39 = scmp.ge.s32.totalorder %s38, 2
      %s40 = scalar_select %p39, 0, %s38
      %s41 = ssub.s32 %s28, %s40
      %s42 = ssub.s32 %s29, %s36
      %s43 = sor.u32 %s41, %s42
      %p44 = scmp.eq.s32.totalorder %s43, 0
      %s46 = sadd.s32 %s45, 1
      %s47 = scalar_select %p44, %s45, %s46
      %p50 = pneg %p44
      %p51 = scmp.eq.s32.totalorder %s21, 1
      %p52 = por %p50, %p51
      %p53 = scmp.ne.s32.totalorder %s45, %s48
      %p54 = scmp.eq.s32.totalorder %s21, 0
      %p55 = por %p53, %p54
      %p56 = scmp.ne.s32.totalorder %s45, %s48
      %p57 = scmp.eq.s32.totalorder %s26, 1
      %p58 = por %p56, %p57
      %p59 = scmp.ne.s32.totalorder %s48, %s49
      %p60 = scmp.eq.s32.totalorder %s26, 0
      %p61 = por %p59, %p60
      %p62 = scmp.ne.s32.totalorder %s48, %s49
      %p63 = scmp.eq.s32.totalorder %s27, 1
      %p64 = por %p62, %p63
      %p66 = scmp.ne.s32.totalorder %s49, %s65
      %p67 = scmp.eq.s32.totalorder %s27, 0
      %p68 = por %p66, %p67
      %s70 = sadd.s32 %s69, 1
      %p73 = scmp.eq.s32.totalorder %s21, 1
      %p74 = scmp.ne.s32.totalorder %s69, %s71
      %p75 = scmp.eq.s32.totalorder %s21, 0
      %p76 = por %p74, %p75
      %p77 = scmp.ne.s32.totalorder %s69, %s71
      %p78 = scmp.eq.s32.totalorder %s26, 1
      %p79 = por %p77, %p78
      %p80 = scmp.ne.s32.totalorder %s71, %s72
      %p81 = scmp.eq.s32.totalorder %s26, 0
      %p82 = por %p80, %p81
      %p83 = scmp.ne.s32.totalorder %s71, %s72
      %p84 = scmp.eq.s32.totalorder %s27, 1
      %p85 = por %p83, %p84
      %p87 = scmp.ne.s32.totalorder %s72, %s86
      %p88 = scmp.eq.s32.totalorder %s27, 0
      %p89 = por %p87, %p88
      %s91 = sadd.s32 %s90, 1
      %p94 = scmp.eq.s32.totalorder %s21, 1
      %p95 = scmp.ne.s32.totalorder %s90, %s92
      %p96 = scmp.eq.s32.totalorder %s21, 0
      %p97 = por %p95, %p96
      %p98 = scmp.ne.s32.totalorder %s90, %s92
      %p99 = scmp.eq.s32.totalorder %s26, 1
      %p100 = por %p98, %p99
      %p101 = scmp.ne.s32.totalorder %s92, %s93
      %p102 = scmp.eq.s32.totalorder %s26, 0
      %p103 = por %p101, %p102
      %p104 = scmp.ne.s32.totalorder %s92, %s93
      %p105 = scmp.eq.s32.totalorder %s27, 1
      %p106 = por %p104, %p105
      %p108 = scmp.ne.s32.totalorder %s93, %s107
      %p109 = scmp.eq.s32.totalorder %s27, 0
      %p110 = por %p108, %p109
      %s112 = sadd.s32 %s111, 1
      %p115 = scmp.eq.s32.totalorder %s21, 1
      %p116 = scmp.ne.s32.totalorder %s111, %s113
      %p117 = scmp.eq.s32.totalorder %s21, 0
      %p118 = por %p116, %p117
      %p119 = scmp.ne.s32.totalorder %s111, %s113
      %p120 = scmp.eq.s32.totalorder %s26, 1
      %p121 = por %p119, %p120
      %p122 = scmp.ne.s32.totalorder %s113, %s114
      %p123 = scmp.eq.s32.totalorder %s26, 0
      %p124 = por %p122, %p123
      %p125 = scmp.ne.s32.totalorder %s113, %s114
      %p126 = scmp.eq.s32.totalorder %s27, 1
      %p127 = por %p125, %p126
      %p129 = scmp.ne.s32.totalorder %s114, %s128
      %p130 = scmp.eq.s32.totalorder %s27, 0
      %p131 = por %p129, %p130
      %s132 = ssub.s32 %s28, %s40
      %s133 = ssub.s32 %s29, %s36
      %s134 = sor.u32 %s132, %s133
      %p135 = scmp.eq.s32.totalorder %s134, 0
      %s137 = sadd.s32 %s136, 1
      %s138 = scalar_select %p135, %s136, %s137
      %p141 = pneg %p135
      %p142 = scmp.eq.s32.totalorder %s21, 1
      %p143 = por %p141, %p142
      %p144 = scmp.ne.s32.totalorder %s136, %s139
      %p145 = scmp.eq.s32.totalorder %s21, 0
      %p146 = por %p144, %p145
      %p147 = scmp.ne.s32.totalorder %s136, %s139
      %p148 = scmp.eq.s32.totalorder %s26, 1
      %p149 = por %p147, %p148
      %p150 = scmp.ne.s32.totalorder %s139, %s140
      %p151 = scmp.eq.s32.totalorder %s26, 0
      %p152 = por %p150, %p151
      %p153 = scmp.ne.s32.totalorder %s139, %s140
      %p154 = scmp.eq.s32.totalorder %s27, 1
      %p155 = por %p153, %p154
      %p157 = scmp.ne.s32.totalorder %s140, %s156
      %p158 = scmp.eq.s32.totalorder %s27, 0
      %p159 = por %p157, %p158
      %s160 = ssub.s32 %s28, %s40
      %s161 = ssub.s32 %s29, %s36
      %s162 = sor.u32 %s160, %s161
      %p163 = scmp.eq.s32.totalorder %s162, 0
      %s165 = sadd.s32 %s164, 1
      %s166 = scalar_select %p163, %s164, %s165
      %p169 = pneg %p163
      %p170 = scmp.eq.s32.totalorder %s21, 1
      %p171 = por %p169, %p170
      %p172 = scmp.ne.s32.totalorder %s164, %s167
      %p173 = scmp.eq.s32.totalorder %s21, 0
      %p174 = por %p172, %p173
      %p175 = scmp.ne.s32.totalorder %s164, %s167
      %p176 = scmp.eq.s32.totalorder %s26, 1
      %p177 = por %p175, %p176
      %p178 = scmp.ne.s32.totalorder %s167, %s168
      %p179 = scmp.eq.s32.totalorder %s26, 0
      %p180 = por %p178, %p179
      %p181 = scmp.ne.s32.totalorder %s167, %s168
      %p182 = scmp.eq.s32.totalorder %s27, 1
      %p183 = por %p181, %p182
      %p185 = scmp.ne.s32.totalorder %s168, %s184
      %p186 = scmp.eq.s32.totalorder %s27, 0
      %p187 = por %p185, %p186
      %p188 = scmp.le.s32.totalorder 1, %s21
      %p189 = scmp.lt.s32.totalorder %s21, 3
      %p190 = pnand %p188, %p189
      %p191 = pneg %p190
      // Predicated region
      $region9: #{tpu_custom_call.1} parent=5 // pred_check
        _
      $region10: #{tpu_custom_call.1} parent=5 // pred_check_branch
        %193 = sbr.rel (%p190) target = $region12
      $region11: #{tpu_custom_call.1} parent=5 // pred_region
        %s194 = ssub.s32 %s21, 1
        // Predicated region
        $region13: #{tpu_custom_call.1} parent=11 // pred_check
          %p195 = pneg %p82
        $region14: #{tpu_custom_call.1} parent=11 // pred_check_branch
          %197 = sbr.rel (%p195) target = $region16
        $region15: #{tpu_custom_call.1} parent=11 // pred_region
          _
        $region16: #{tpu_custom_call.1} parent=11 // pred_fallthru
          _
        // Predicated region
        $region17: #{tpu_custom_call.1} parent=11 // pred_check
          %p198 = pneg %p103
        $region18: #{tpu_custom_call.1} parent=11 // pred_check_branch
          %200 = sbr.rel (%p198) target = $region20
        $region19: #{tpu_custom_call.1} parent=11 // pred_region
          _
        $region20: #{tpu_custom_call.1} parent=11 // pred_fallthru
          _
        // Predicated region
        $region21: #{tpu_custom_call.1} parent=11 // pred_check
          %p201 = pneg %p124
        $region22: #{tpu_custom_call.1} parent=11 // pred_check_branch
          %203 = sbr.rel (%p201) target = $region24
        $region23: #{tpu_custom_call.1} parent=11 // pred_region
          _
        $region24: #{tpu_custom_call.1} parent=11 // pred_fallthru
          _
      $region12: #{tpu_custom_call.1} parent=5 // pred_fallthru
        _
      %p204 = scmp.lt.s32.totalorder %s21, 2
      // Predicated region
      $region25: #{tpu_custom_call.1} parent=5 // pred_check
        %p205 = pneg %p204
      $region26: #{tpu_custom_call.1} parent=5 // pred_check_branch
        %207 = sbr.rel (%p205) target = $region28
      $region27: #{tpu_custom_call.1} parent=5 // pred_region
        // Predicated region
        $region29: #{tpu_custom_call.1} parent=27 // pred_check
          %p208 = pneg %p55
        $region30: #{tpu_custom_call.1} parent=27 // pred_check_branch
          %210 = sbr.rel (%p208) target = $region32
        $region31: #{tpu_custom_call.1} parent=27 // pred_region
          %s211 = sand.u32 %s45, 1
          %s212 = scalar_lea.sflag [#allocation3], %s211
          %s213 = sand.u32 %s45, 1
          %s214 = smul.addr %s213, 8
          %s215 = scalar_lea.vmem [#allocation2], %s214
          %s216 = smul.u32 2, %s29
          %218 = vsyncadd %s212, 0
          %s219 = smul.addr %s28, 2
          %s220 = sadd.s32 %s216, %s219
          %s221 = smul.addr %s220, 4
          %s222 = scalar_lea.hbm %s0, %s221
          %s224 = sshll.u32 %s222, 4
          %s225 = int_to_ptr.hbm [resolvable:$true] %s224
          %s226 = sshll.u32 %s215, 4
          %s227 = int_to_ptr.vmem [resolvable:$true] %s226
          %229 = dma.hbm_to_vmem [thread:$0]  %s225, 128, %s227, %s212
        $region32: #{tpu_custom_call.1} parent=27 // pred_fallthru
          _
      $region28: #{tpu_custom_call.1} parent=5 // pred_fallthru
        _
      %p230 = scmp.le.s32.totalorder 1, %s21
      %p231 = scmp.lt.s32.totalorder %s21, 3
      %p232 = pnand %p230, %p231
      %p233 = pneg %p232
      // Predicated region
      $region33: #{tpu_custom_call.1} parent=5 // pred_check
        _
      $region34: #{tpu_custom_call.1} parent=5 // pred_check_branch
        %235 = sbr.rel (%p232) target = $region36
      $region35: #{tpu_custom_call.1} parent=5 // pred_region
        %s236 = ssub.s32 %s21, 1
        %s237 = sand.u32 %s48, 1
        %s238 = scalar_lea.sflag [#allocation3], %s237
        %s239 = sand.u32 %s48, 1
        %s240 = smul.addr %s239, 8
        %s241 = scalar_lea.vmem [#allocation2], %s240
        // Predicated region
        $region37: #{tpu_custom_call.1} parent=35 // pred_check
          %p242 = pneg %p61
        $region38: #{tpu_custom_call.1} parent=35 // pred_check_branch
          %244 = sbr.rel (%p242) target = $region40
        $region39: #{tpu_custom_call.1} parent=35 // pred_region
          %246 = dma.done %s238, 128
        $region40: #{tpu_custom_call.1} parent=35 // pred_fallthru
          _
        %s247 = sand.u32 %s48, 1
        %s248 = scalar_lea.sflag [#allocation3], %s247
        %s249 = sand.u32 %s48, 1
        %s250 = smul.addr %s249, 8
        %s251 = scalar_lea.vmem [#allocation2], %s250
        %p252 = pneg %p61
        %p253 = pneg %p58
        %p254 = pneg %p82
        %p255 = pneg %p79
        %p256 = pneg %p103
        %p257 = pneg %p100
        %p258 = pneg %p124
        %p259 = pneg %p121
        %p260 = pneg %p152
        %p261 = pneg %p149
        %s262 = sand.u32 %s139, 1
        %s263 = scalar_lea.sflag [#allocation4], %s262
        %s264 = sand.u32 %s139, 1
        %s265 = smul.addr %s264, 8
        %s266 = scalar_lea.vmem [#allocation5], %s265
        %p267 = pneg %p180
        %p268 = pneg %p177
        %s269 = sand.u32 %s167, 1
        %s270 = scalar_lea.sflag [#allocation7], %s269
        %s271 = sand.u32 %s167, 1
        %s272 = smul.addr %s271, 8
        %s273 = scalar_lea.vmem [#allocation6], %s272
        %s274 = smul.u32 2, %s31
        %s275 = smul.u32 2, %s31
        %s276 = smul.u32 2, %s31
        %v277 = vld [vmem:[%s241] sm:$0xff]
        %v278 = vld [vmem:[%s2] sm:$0xf]
        %v279 = vld [vmem:[%s1] sm:$0xf]
        %281 = vset.pattern.permute.xlu0 0
        %282 = vperm.xlu0 %281, %v279
        %v283 = vpop.permute.xlu0 %282
        %v285 = vunpack.c.l.s4 839922192
        %v286 = vunpack.c.0.s8 %v285
        %v287 = vperm.slane %v283, %v286
        %v289 = vadd.f32 %v277, %v287
        %291 = vset.pattern.permute.xlu0 0
        %292 = vperm.xlu0 %291, %v278
        %v293 = vpop.permute.xlu0 %292
        %296 = vst [vmem:[#allocation1] ss:$2 sm:$0xff] %v289
        %v297 = vld.sshfl [vmem:[#allocation1] sm:$0xff pattern:$0x75316420]
        %v298 = vld.sshfl [vmem:[#allocation1 + $0x8] sm:$0xff pattern:$0x75316420]
        %v301 = vmul.f32 %v293, %v297
        %v302 = vmul.f32 %v293, %v298
        %v305 = vrot.slane %v302, 4
        %vm306 = vcmask 1043456
        %v307 = vsel %vm306, %v301, %v305
        %309 = vst [vmem:[%s266] sm:$0xff] %v307
        %v310 = vld [vmem:[%s3] sm:$0xf]
        %vm311 = vcmask 31744
        %v313 = vsel %vm311, %v310, 0
        %v315 = vsel %vm306, %v301, 0
        %v317 = vsel %vm306, %v302, 0
        %319 = vmatpush.msra.mxu0 0.0
        %320 = vmatpush.msra.mxu0 0.0
        %321 = vmatpush.msra.mxu0 0.0
        %322 = vmatpush.msra.mxu0 0.0
        %323 = vmatpush.msra.mxu0 0.0
        %324 = vmatpush.msra.mxu0 0.0
        %325 = vmatpush.msra.mxu0 0.0
        %326 = vmatpush.msra.mxu0 0.0
        %327 = vmatpush.msra.mxu0 0.0
        %328 = vmatpush.msra.mxu0 0.0
        %329 = vmatpush.msra.mxu0 0.0
        %330 = vmatpush.msra.mxu0 0.0
        %331 = vmatpush.msra.mxu0 0.0
        %332 = vmatpush.msra.mxu0 0.0
        %333 = vmatpush.msra.mxu0 0.0
        %334 = vmatpush.msra.mxu0 %v315
        %335 = vmatmul.f32.gmra.mxu0 %v313
        %v336 = vpop.f32.mrf.mxu0
        %v337 = vadd.f32 0.0, %v336
        %338 = vdwg.mxu0
        %339 = vmatpush.msra.mxu0 0.0
        %340 = vmatpush.msra.mxu0 0.0
        %341 = vmatpush.msra.mxu0 0.0
        %342 = vmatpush.msra.mxu0 0.0
        %343 = vmatpush.msra.mxu0 0.0
        %344 = vmatpush.msra.mxu0 0.0
        %345 = vmatpush.msra.mxu0 0.0
        %346 = vmatpush.msra.mxu0 0.0
        %347 = vmatpush.msra.mxu0 0.0
        %348 = vmatpush.msra.mxu0 0.0
        %349 = vmatpush.msra.mxu0 0.0
        %350 = vmatpush.msra.mxu0 0.0
        %351 = vmatpush.msra.mxu0 0.0
        %352 = vmatpush.msra.mxu0 0.0
        %353 = vmatpush.msra.mxu0 0.0
        %354 = vmatpush.msra.mxu0 %v317
        %355 = vmatmul.f32.gmra.mxu0 %v313
        %v356 = vpop.f32.mrf.mxu0
        %v357 = vadd.f32 0.0, %v356
        %358 = vdwg.mxu0
        %v361 = vrot.slane %v357, 4
        %v362 = vsel %vm306, %v337, %v361
        %364 = vst [vmem:[%s273] sm:$0xff] %v362
        %s365 = sand.u32 %s139, 1
        %s366 = scalar_lea.sflag [#allocation4], %s365
        %s367 = sand.u32 %s139, 1
        %s368 = smul.addr %s367, 8
        %s369 = scalar_lea.vmem [#allocation5], %s368
        %s370 = sand.u32 %s167, 1
        %s371 = scalar_lea.sflag [#allocation7], %s370
        %s372 = sand.u32 %s167, 1
        %s373 = smul.addr %s372, 8
        %s374 = scalar_lea.vmem [#allocation6], %s373
        // Predicated region
        $region41: #{tpu_custom_call.1} parent=35 // pred_check
          %p375 = pneg %p149
        $region42: #{tpu_custom_call.1} parent=35 // pred_check_branch
          %377 = sbr.rel (%p375) target = $region44
        $region43: #{tpu_custom_call.1} parent=35 // pred_region
          %s378 = smul.u32 2, %s31
          %380 = vsyncadd %s366, 0
          %s381 = smul.addr %s30, 2
          %s382 = sadd.s32 %s378, %s381
          %s383 = smul.addr %s382, 4
          %s384 = scalar_lea.hbm %s4, %s383
          %s386 = sshll.u32 %s369, 4
          %s387 = int_to_ptr.vmem [resolvable:$true] %s386
          %s388 = sshll.u32 %s384, 4
          %s389 = int_to_ptr.hbm [resolvable:$true] %s388
          %391 = dma.vmem_to_hbm [thread:$0]  %s387, 128, %s389, %s366
        $region44: #{tpu_custom_call.1} parent=35 // pred_fallthru
          _
        // Predicated region
        $region45: #{tpu_custom_call.1} parent=35 // pred_check
          %p392 = pneg %p177
        $region46: #{tpu_custom_call.1} parent=35 // pred_check_branch
          %394 = sbr.rel (%p392) target = $region48
        $region47: #{tpu_custom_call.1} parent=35 // pred_region
          %s395 = smul.u32 2, %s31
          %397 = vsyncadd %s371, 0
          %s398 = smul.addr %s30, 2
          %s399 = sadd.s32 %s395, %s398
          %s400 = smul.addr %s399, 4
          %s401 = scalar_lea.hbm %s5, %s400
          %s403 = sshll.u32 %s374, 4
          %s404 = int_to_ptr.vmem [resolvable:$true] %s403
          %s405 = sshll.u32 %s401, 4
          %s406 = int_to_ptr.hbm [resolvable:$true] %s405
          %408 = dma.vmem_to_hbm [thread:$0]  %s404, 128, %s406, %s371
        $region48: #{tpu_custom_call.1} parent=35 // pred_fallthru
          _
      $region36: #{tpu_custom_call.1} parent=5 // pred_fallthru
        _
      %p409 = scmp.le.s32.totalorder 2, %s21
      // Predicated region
      $region49: #{tpu_custom_call.1} parent=5 // pred_check
        %p410 = pneg %p409
      $region50: #{tpu_custom_call.1} parent=5 // pred_check_branch
        %412 = sbr.rel (%p410) target = $region52
      $region51: #{tpu_custom_call.1} parent=5 // pred_region
        %s413 = ssub.s32 %s21, 2
        // Predicated region
        $region53: #{tpu_custom_call.1} parent=51 // pred_check
          %p414 = pneg %p155
        $region54: #{tpu_custom_call.1} parent=51 // pred_check_branch
          %416 = sbr.rel (%p414) target = $region56
        $region55: #{tpu_custom_call.1} parent=51 // pred_region
          %s417 = sand.u32 %s140, 1
          %s418 = scalar_lea.sflag [#allocation4], %s417
          %s419 = sand.u32 %s140, 1
          %s420 = smul.addr %s419, 8
          %s421 = scalar_lea.vmem [#allocation5], %s420
          %423 = dma.done %s418, 128
        $region56: #{tpu_custom_call.1} parent=51 // pred_fallthru
          _
        // Predicated region
        $region57: #{tpu_custom_call.1} parent=51 // pred_check
          %p424 = pneg %p183
        $region58: #{tpu_custom_call.1} parent=51 // pred_check_branch
          %426 = sbr.rel (%p424) target = $region60
        $region59: #{tpu_custom_call.1} parent=51 // pred_region
          %s427 = sand.u32 %s168, 1
          %s428 = scalar_lea.sflag [#allocation7], %s427
          %s429 = sand.u32 %s168, 1
          %s430 = smul.addr %s429, 8
          %s431 = scalar_lea.vmem [#allocation6], %s430
          %433 = dma.done %s428, 128
        $region60: #{tpu_custom_call.1} parent=51 // pred_fallthru
          _
      $region52: #{tpu_custom_call.1} parent=5 // pred_fallthru
        _
    $region6: #{tpu_custom_call.1} parent=1 // loop_footer
      %s25 = sadd.s32 1, %s21
    $region7: #{tpu_custom_call.1} parent=1 // loop_footer_branch
      %20 = sbr.rel target = $region3
    $region8: #{tpu_custom_call.1} parent=1 // loop_exit
      _
    %434 = vsyncpa [#allocation3], 1
    %s435 = scalar_lea.sflag [#allocation3], 1
    %436 = vsyncpa %s435, 1
    %437 = vsyncpa [#allocation4], 1
    %s438 = scalar_lea.sflag [#allocation4], 1
    %439 = vsyncpa %s438, 1
    %440 = vsyncpa [#allocation7], 1
    %s441 = scalar_lea.sflag [#allocation7], 1
    %442 = vsyncpa %s441, 1

</llo_original>
